<compile_context>
chip_gen: v6e
topology: v6e:2x2x1
jax: 0.10.0
libtpu: 0.0.40
codegen_flags: <defaults>
</compile_context>

<pallas_src>
import functools
import math

import jax
import jax.numpy as jnp
from jax.experimental import pallas as pl
from jax.experimental.pallas import tpu as pltpu


def _round_up(n: int, m: int) -> int:
    return ((n + m - 1) // m) * m


def _choose_tile_rows(R: int, granule: int) -> int:
    """Row-tile size: big enough for bandwidth, >=2 tiles when possible (megacore),
    capped so double-buffered tiles stay well inside v7x's 32 MiB scoped VMEM."""
    max_tile = 512  # multiple of 8/16/32; sized for v7x (64 MiB VMEM, 32 MiB scoped)
    if R <= granule:
        return granule
    half = -(-R // 2)  # aim for at least two row tiles
    return max(granule, min(max_tile, _round_up(half, granule)))


def _make_kernel(num_layers, num_bands, F, H, shifts, tile_rows, pooling, compute_dtype):
    """Kernel body for a fixed MLP depth / band count / offset set / pooling."""
    n_off = len(shifts)

    def kernel(*refs):
        x_ref = refs[0]
        param_refs = refs[1:1 + 2 * num_layers]   # interleaved (w, b) per layer
        o_ref = refs[1 + 2 * num_layers]

        # Load the whole (tile_rows, num_bands*F) tile once; shared by both bands.
        x_all = x_ref[...]

        band_outs = []
        for b in range(num_bands):
            xb = x_all[:, b * F:(b + 1) * F]      # (tile_rows, F), compute dtype

            # In-kernel electrode roll (static lane slice + concat == roll of the
            # flattened feature axis), stacked along rows => one tall matmul per
            # layer (M = n_off * tile_rows) instead of n_off tiny ones.
            rolled = []
            for s in shifts:
                if s == 0:
                    rolled.append(xb)
                else:
                    rolled.append(
                        jnp.concatenate([xb[:, F - s:], xb[:, :F - s]], axis=1)
                    )
            h = jnp.concatenate(rolled, axis=0) if n_off > 1 else rolled[0]

            for layer in range(num_layers):
                w = param_refs[2 * layer][b]          # (in_l, out_l), compute dtype
                bias = param_refs[2 * layer + 1][b]   # (1, out_l), f32
                # MXU in compute dtype, accumulate in f32; bias add + ReLU on the
                # VPU in f32 (works on v5e which has no bf16 VPU).
                h = jnp.dot(h, w, preferred_element_type=jnp.float32)
                h = jnp.maximum(h + bias, 0.0)
                if layer + 1 < num_layers:
                    h = h.astype(compute_dtype)       # bf16 feed for next MXU call

            # Pool over the n_off row groups, in-register (no scratch, no pl.when).
            pooled = h[0:tile_rows]
            for o in range(1, n_off):
                blk = h[o * tile_rows:(o + 1) * tile_rows]
                pooled = pooled + blk if pooling == "mean" else jnp.maximum(pooled, blk)
            if pooling == "mean" and n_off > 1:
                pooled = pooled * (1.0 / n_off)
            band_outs.append(pooled)

        # Single full-block, lane-dense store: (tile_rows, num_bands * H).
        out = band_outs[0] if num_bands == 1 else jnp.concatenate(band_outs, axis=1)
        o_ref[...] = out.astype(o_ref.dtype)

    return kernel


def multiband_rotation_invariant_mlp(
    x: jax.Array,
    weights: list[jax.Array],   # per layer: (num_bands, in_l, out_l)  (note: (in, out))
    biases: list[jax.Array],    # per layer: (num_bands, 1, out_l)
    offsets=(-1, 0, 1),
    pooling: str = "mean",
    compute_dtype=jnp.bfloat16,
) -> jax.Array:
    """x: (T, N, num_bands, C, ...) -> (T, N, num_bands, mlp_features[-1])."""
    assert pooling in ("mean", "max")
    assert len(weights) > 0 and len(weights) == len(biases)
    offsets = tuple(offsets) if len(offsets) > 0 else (0,)
    num_layers = len(weights)

    T, N, num_bands = x.shape[0], x.shape[1], x.shape[2]
    feat_dims = x.shape[3:]
    assert len(feat_dims) >= 1
    F = int(math.prod(feat_dims))
    rest = int(math.prod(feat_dims[1:])) if len(feat_dims) > 1 else 1
    R = T * N
    H_last = int(weights[-1].shape[-1])
    n_off = len(offsets)
    # Rolling the C axis by o == rolling the flattened (C * rest) axis by o * rest.
    shifts = tuple((o * rest) % F for o in offsets)

    # Row tiling (sublane granule depends on compute dtype: f32->8, bf16->16).
    granule = max(8, 32 // jnp.dtype(compute_dtype).itemsize)
    tile_rows = _choose_tile_rows(R, granule)
    R_pad = _round_up(R, tile_rows)
    n_row_tiles = R_pad // tile_rows

    # Free reshape: (T, N, num_bands, C, ...) is contiguous as (R, num_bands*F).
    x2 = x.reshape(R, num_bands * F)
    if R_pad != R:
        x2 = jnp.pad(x2, ((0, R_pad - R), (0, 0)))
    x2 = x2.astype(compute_dtype)

    inputs = [x2]
    in_specs = [pl.BlockSpec((tile_rows, num_bands * F), lambda r: (r, 0))]
    for w, b in zip(weights, biases):
        inputs.append(w.astype(compute_dtype))            # MXU operand
        inputs.append(b.astype(jnp.float32))              # VPU bias add in f32
        in_specs.append(pl.BlockSpec(w.shape, lambda r: (0, 0, 0)))   # resident
        in_specs.append(pl.BlockSpec(b.shape, lambda r: (0, 0, 0)))   # resident

    out_spec = pl.BlockSpec((tile_rows, num_bands * H_last), lambda r: (r, 0))

    kernel = _make_kernel(
        num_layers, num_bands, F, H_last, shifts, tile_rows, pooling, compute_dtype
    )

    out = pl.pallas_call(
        kernel,
        out_shape=jax.ShapeDtypeStruct((R_pad, num_bands * H_last), jnp.float32),
        grid_spec=pltpu.PrefetchScalarGridSpec(
            num_scalar_prefetch=0,
            grid=(n_row_tiles,),
            in_specs=in_specs,
            out_specs=out_spec,
        ),
        compiler_params=pltpu.CompilerParams(
            dimension_semantics=("parallel",),
        ),
    )(*inputs)

    # Free reshape back: (R, num_bands*H) -> (T, N, num_bands, H). No transpose.
    return out[:R].reshape(T, N, num_bands, H_last)


def reference_jax(x, weights, biases, offsets=(-1, 0, 1), pooling="mean"):
    """Pure-JAX (f32) reference mirroring the PyTorch module semantics."""
    offsets = tuple(offsets) if len(offsets) > 0 else (0,)
    T, N, num_bands = x.shape[0], x.shape[1], x.shape[2]
    outs = []
    for b in range(num_bands):
        xb = x[:, :, b].astype(jnp.float32)  # (T, N, C, ...)
        xs = jnp.stack([jnp.roll(xb, o, axis=2) for o in offsets], axis=2)
        h = xs.reshape(T, N, len(offsets), -1)
        for w, bias in zip(weights, biases):
            h = jnp.maximum(h @ w[b].astype(jnp.float32) + bias[b].astype(jnp.float32), 0.0)
        outs.append(h.mean(axis=2) if pooling == "mean" else h.max(axis=2))
    return jnp.stack(outs, axis=2)


if __name__ == "__main__":
    # Small shapes consistent with the module's forward:
    #   x: (T=16, N=2, num_bands=2, C=16) -> in_features = 16, mlp_features = (32, 32)
    T, N, num_bands, C = 16, 2, 2, 16
    in_features = C
    mlp_features = (32, 32)
    offsets = (-1, 0, 1)

    key = jax.random.PRNGKey(0)
    kx, kp = jax.random.split(key)
    x = jax.random.normal(kx, (T, N, num_bands, C), dtype=jnp.float32)

    # Deterministic per-band parameters (PyTorch-Linear-like uniform init).
    # NOTE: weights are stored as (in, out); a real PyTorch port would transpose
    # nn.Linear.weight (which is (out, in)).
    weights, biases = [], []
    fan_in = in_features
    for out_f in mlp_features:
        kp, kw, kb = jax.random.split(kp, 3)
        bound = 1.0 / math.sqrt(fan_in)
        weights.append(
            jax.random.uniform(kw, (num_bands, fan_in, out_f), jnp.float32, -bound, bound)
        )
        biases.append(
            jax.random.uniform(kb, (num_bands, 1, out_f), jnp.float32, -bound, bound)
        )
        fan_in = out_f

    ref_mean = reference_jax(x, weights, biases, offsets=offsets, pooling="mean")
    ref_max = reference_jax(x, weights, biases, offsets=offsets, pooling="max")

    # f32 compute path: exact check against the reference (mean + max pooling).
    out_mean_f32 = jax.block_until_ready(
        multiband_rotation_invariant_mlp(
            x, weights, biases, offsets=offsets, pooling="mean",
            compute_dtype=jnp.float32)
    )
    assert out_mean_f32.shape == (T, N, num_bands, mlp_features[-1]), out_mean_f32.shape
    assert jnp.allclose(out_mean_f32, ref_mean, atol=1e-5, rtol=1e-5), (
        float(jnp.max(jnp.abs(out_mean_f32 - ref_mean)))
    )

    out_max_f32 = jax.block_until_ready(
        multiband_rotation_invariant_mlp(
            x, weights, biases, offsets=offsets, pooling="max",
            compute_dtype=jnp.float32)
    )
    assert jnp.allclose(out_max_f32, ref_max, atol=1e-5, rtol=1e-5), (
        float(jnp.max(jnp.abs(out_max_f32 - ref_max)))
    )

    # bf16 MXU-operand path (default perf config): looser tolerance vs f32 reference.
    out_mean_bf16 = jax.block_until_ready(
        multiband_rotation_invariant_mlp(
            x, weights, biases, offsets=offsets, pooling="mean",
            compute_dtype=jnp.bfloat16)
    )
    assert jnp.allclose(out_mean_bf16, ref_mean, atol=3e-2, rtol=3e-2), (
        float(jnp.max(jnp.abs(out_mean_bf16 - ref_mean)))
    )

    print("KERNEL_OK")
</pallas_src>

<mosaic_0001>
module attributes {stable_mosaic.version = 11 : i64} {
  func.func @kernel(%arg0: i32, %arg1: memref<16x32xf32, #tpu.memory_space<vmem>>, %arg2: memref<2x16x32xf32, #tpu.memory_space<vmem>>, %arg3: memref<2x1x32xf32, #tpu.memory_space<vmem>>, %arg4: memref<2x32x32xf32, #tpu.memory_space<vmem>>, %arg5: memref<2x1x32xf32, #tpu.memory_space<vmem>>, %arg6: memref<16x64xf32, #tpu.memory_space<vmem>>) attributes {dimension_semantics = [#tpu.dimension_semantics<parallel>], iteration_bounds = array<i64: 2>, scalar_prefetch = 0 : i64, scratch_operands = 0 : i64, tpu.core_type = #tpu.core_type<tc>, window_params = [{transform_indices = @transform_0, window_bounds = array<i64: 16, 32>}, {pipeline_mode = #tpu.pipeline_mode<synchronous>, transform_indices = @transform_1, window_bounds = array<i64: 2, 16, 32>}, {pipeline_mode = #tpu.pipeline_mode<synchronous>, transform_indices = @transform_2, window_bounds = array<i64: 2, 1, 32>}, {pipeline_mode = #tpu.pipeline_mode<synchronous>, transform_indices = @transform_3, window_bounds = array<i64: 2, 32, 32>}, {pipeline_mode = #tpu.pipeline_mode<synchronous>, transform_indices = @transform_4, window_bounds = array<i64: 2, 1, 32>}, {transform_indices = @transform_5, window_bounds = array<i64: 16, 64>}]} {
    %c0 = arith.constant 0 : index
    %c0_0 = arith.constant 0 : index
    %0 = vector.load %arg1[%c0, %c0_0] : memref<16x32xf32, #tpu.memory_space<vmem>>, vector<16x32xf32>
    %1 = vector.extract_strided_slice %0 {offsets = [0, 0], sizes = [16, 16], strides = [1, 1]} : vector<16x32xf32> to vector<16x16xf32>
    %2 = vector.extract_strided_slice %1 {offsets = [0, 1], sizes = [16, 15], strides = [1, 1]} : vector<16x16xf32> to vector<16x15xf32>
    %3 = vector.extract_strided_slice %1 {offsets = [0, 0], sizes = [16, 1], strides = [1, 1]} : vector<16x16xf32> to vector<16x1xf32>
    %4 = tpu.concatenate %2, %3 in 1 : vector<16x15xf32>, vector<16x1xf32> -> vector<16x16xf32>
    %5 = vector.extract_strided_slice %1 {offsets = [0, 15], sizes = [16, 1], strides = [1, 1]} : vector<16x16xf32> to vector<16x1xf32>
    %6 = vector.extract_strided_slice %1 {offsets = [0, 0], sizes = [16, 15], strides = [1, 1]} : vector<16x16xf32> to vector<16x15xf32>
    %7 = tpu.concatenate %5, %6 in 1 : vector<16x1xf32>, vector<16x15xf32> -> vector<16x16xf32>
    %8 = tpu.concatenate %4, %1, %7 in 0 : vector<16x16xf32>, vector<16x16xf32>, vector<16x16xf32> -> vector<48x16xf32>
    %c0_1 = arith.constant 0 : index
    %c0_2 = arith.constant 0 : index
    %c0_3 = arith.constant 0 : index
    %9 = vector.load %arg2[%c0_1, %c0_2, %c0_3] : memref<2x16x32xf32, #tpu.memory_space<vmem>>, vector<1x16x32xf32>
    %10 = vector.shape_cast %9 : vector<1x16x32xf32> to vector<16x32xf32>
    %c0_4 = arith.constant 0 : index
    %c0_5 = arith.constant 0 : index
    %c0_6 = arith.constant 0 : index
    %11 = vector.load %arg3[%c0_4, %c0_5, %c0_6] : memref<2x1x32xf32, #tpu.memory_space<vmem>>, vector<1x1x32xf32>
    %12 = vector.shape_cast %11 : vector<1x1x32xf32> to vector<1x32xf32>
    %cst = arith.constant dense<0.000000e+00> : vector<48x32xf32>
    %13 = tpu.matmul %8, %10, %cst {dimension_numbers = #tpu.dot_dimension_numbers<[1], [0], [0], [1], [0, 0, 1, 1], [], []>} : vector<48x16xf32>, vector<16x32xf32>, vector<48x32xf32> -> vector<48x32xf32>
    %14 = vector.broadcast %12 : vector<1x32xf32> to vector<48x32xf32>
    %15 = arith.addf %13, %14 : vector<48x32xf32>
    %cst_7 = arith.constant 0.000000e+00 : f32
    %16 = vector.broadcast %cst_7 : f32 to vector<48x32xf32>
    %17 = arith.maximumf %15, %16 : vector<48x32xf32>
    %c0_8 = arith.constant 0 : index
    %c0_9 = arith.constant 0 : index
    %c0_10 = arith.constant 0 : index
    %18 = vector.load %arg4[%c0_8, %c0_9, %c0_10] : memref<2x32x32xf32, #tpu.memory_space<vmem>>, vector<1x32x32xf32>
    %19 = vector.shape_cast %18 : vector<1x32x32xf32> to vector<32x32xf32>
    %c0_11 = arith.constant 0 : index
    %c0_12 = arith.constant 0 : index
    %c0_13 = arith.constant 0 : index
    %20 = vector.load %arg5[%c0_11, %c0_12, %c0_13] : memref<2x1x32xf32, #tpu.memory_space<vmem>>, vector<1x1x32xf32>
    %21 = vector.shape_cast %20 : vector<1x1x32xf32> to vector<1x32xf32>
    %cst_14 = arith.constant dense<0.000000e+00> : vector<48x32xf32>
    %22 = tpu.matmul %17, %19, %cst_14 {dimension_numbers = #tpu.dot_dimension_numbers<[1], [0], [0], [1], [0, 0, 1, 1], [], []>} : vector<48x32xf32>, vector<32x32xf32>, vector<48x32xf32> -> vector<48x32xf32>
    %23 = vector.broadcast %21 : vector<1x32xf32> to vector<48x32xf32>
    %24 = arith.addf %22, %23 : vector<48x32xf32>
    %cst_15 = arith.constant 0.000000e+00 : f32
    %25 = vector.broadcast %cst_15 : f32 to vector<48x32xf32>
    %26 = arith.maximumf %24, %25 : vector<48x32xf32>
    %27 = vector.extract_strided_slice %26 {offsets = [0, 0], sizes = [16, 32], strides = [1, 1]} : vector<48x32xf32> to vector<16x32xf32>
    %28 = vector.extract_strided_slice %26 {offsets = [16, 0], sizes = [16, 32], strides = [1, 1]} : vector<48x32xf32> to vector<16x32xf32>
    %29 = arith.addf %27, %28 : vector<16x32xf32>
    %30 = vector.extract_strided_slice %26 {offsets = [32, 0], sizes = [16, 32], strides = [1, 1]} : vector<48x32xf32> to vector<16x32xf32>
    %31 = arith.addf %29, %30 : vector<16x32xf32>
    %cst_16 = arith.constant 0.333333343 : f32
    %32 = vector.broadcast %cst_16 : f32 to vector<16x32xf32>
    %33 = arith.mulf %31, %32 : vector<16x32xf32>
    %34 = vector.extract_strided_slice %0 {offsets = [0, 16], sizes = [16, 16], strides = [1, 1]} : vector<16x32xf32> to vector<16x16xf32>
    %35 = vector.extract_strided_slice %34 {offsets = [0, 1], sizes = [16, 15], strides = [1, 1]} : vector<16x16xf32> to vector<16x15xf32>
    %36 = vector.extract_strided_slice %34 {offsets = [0, 0], sizes = [16, 1], strides = [1, 1]} : vector<16x16xf32> to vector<16x1xf32>
    %37 = tpu.concatenate %35, %36 in 1 : vector<16x15xf32>, vector<16x1xf32> -> vector<16x16xf32>
    %38 = vector.extract_strided_slice %34 {offsets = [0, 15], sizes = [16, 1], strides = [1, 1]} : vector<16x16xf32> to vector<16x1xf32>
    %39 = vector.extract_strided_slice %34 {offsets = [0, 0], sizes = [16, 15], strides = [1, 1]} : vector<16x16xf32> to vector<16x15xf32>
    %40 = tpu.concatenate %38, %39 in 1 : vector<16x1xf32>, vector<16x15xf32> -> vector<16x16xf32>
    %41 = tpu.concatenate %37, %34, %40 in 0 : vector<16x16xf32>, vector<16x16xf32>, vector<16x16xf32> -> vector<48x16xf32>
    %c1 = arith.constant 1 : index
    %c0_17 = arith.constant 0 : index
    %c0_18 = arith.constant 0 : index
    %42 = vector.load %arg2[%c1, %c0_17, %c0_18] : memref<2x16x32xf32, #tpu.memory_space<vmem>>, vector<1x16x32xf32>
    %43 = vector.shape_cast %42 : vector<1x16x32xf32> to vector<16x32xf32>
    %c1_19 = arith.constant 1 : index
    %c0_20 = arith.constant 0 : index
    %c0_21 = arith.constant 0 : index
    %44 = vector.load %arg3[%c1_19, %c0_20, %c0_21] : memref<2x1x32xf32, #tpu.memory_space<vmem>>, vector<1x1x32xf32>
    %45 = vector.shape_cast %44 : vector<1x1x32xf32> to vector<1x32xf32>
    %cst_22 = arith.constant dense<0.000000e+00> : vector<48x32xf32>
    %46 = tpu.matmul %41, %43, %cst_22 {dimension_numbers = #tpu.dot_dimension_numbers<[1], [0], [0], [1], [0, 0, 1, 1], [], []>} : vector<48x16xf32>, vector<16x32xf32>, vector<48x32xf32> -> vector<48x32xf32>
    %47 = vector.broadcast %45 : vector<1x32xf32> to vector<48x32xf32>
    %48 = arith.addf %46, %47 : vector<48x32xf32>
    %cst_23 = arith.constant 0.000000e+00 : f32
    %49 = vector.broadcast %cst_23 : f32 to vector<48x32xf32>
    %50 = arith.maximumf %48, %49 : vector<48x32xf32>
    %c1_24 = arith.constant 1 : index
    %c0_25 = arith.constant 0 : index
    %c0_26 = arith.constant 0 : index
    %51 = vector.load %arg4[%c1_24, %c0_25, %c0_26] : memref<2x32x32xf32, #tpu.memory_space<vmem>>, vector<1x32x32xf32>
    %52 = vector.shape_cast %51 : vector<1x32x32xf32> to vector<32x32xf32>
    %c1_27 = arith.constant 1 : index
    %c0_28 = arith.constant 0 : index
    %c0_29 = arith.constant 0 : index
    %53 = vector.load %arg5[%c1_27, %c0_28, %c0_29] : memref<2x1x32xf32, #tpu.memory_space<vmem>>, vector<1x1x32xf32>
    %54 = vector.shape_cast %53 : vector<1x1x32xf32> to vector<1x32xf32>
    %cst_30 = arith.constant dense<0.000000e+00> : vector<48x32xf32>
    %55 = tpu.matmul %50, %52, %cst_30 {dimension_numbers = #tpu.dot_dimension_numbers<[1], [0], [0], [1], [0, 0, 1, 1], [], []>} : vector<48x32xf32>, vector<32x32xf32>, vector<48x32xf32> -> vector<48x32xf32>
    %56 = vector.broadcast %54 : vector<1x32xf32> to vector<48x32xf32>
    %57 = arith.addf %55, %56 : vector<48x32xf32>
    %cst_31 = arith.constant 0.000000e+00 : f32
    %58 = vector.broadcast %cst_31 : f32 to vector<48x32xf32>
    %59 = arith.maximumf %57, %58 : vector<48x32xf32>
    %60 = vector.extract_strided_slice %59 {offsets = [0, 0], sizes = [16, 32], strides = [1, 1]} : vector<48x32xf32> to vector<16x32xf32>
    %61 = vector.extract_strided_slice %59 {offsets = [16, 0], sizes = [16, 32], strides = [1, 1]} : vector<48x32xf32> to vector<16x32xf32>
    %62 = arith.addf %60, %61 : vector<16x32xf32>
    %63 = vector.extract_strided_slice %59 {offsets = [32, 0], sizes = [16, 32], strides = [1, 1]} : vector<48x32xf32> to vector<16x32xf32>
    %64 = arith.addf %62, %63 : vector<16x32xf32>
    %cst_32 = arith.constant 0.333333343 : f32
    %65 = vector.broadcast %cst_32 : f32 to vector<16x32xf32>
    %66 = arith.mulf %64, %65 : vector<16x32xf32>
    %67 = tpu.concatenate %33, %66 in 1 : vector<16x32xf32>, vector<16x32xf32> -> vector<16x64xf32>
    %c0_33 = arith.constant 0 : index
    %c0_34 = arith.constant 0 : index
    %68 = vector.load %arg6[%c0_33, %c0_34] : memref<16x64xf32, #tpu.memory_space<vmem>>, vector<16x64xf32>
    tpu.vector_store %arg6[%c0_33, %c0_34], %67 {strides = array<i32>} : memref<16x64xf32, #tpu.memory_space<vmem>>, vector<16x64xf32>,
    return
  }
  func.func @transform_0(%arg0: i32) -> (i32, i32) {
    %c0_i32 = arith.constant 0 : i32
    %c0_i32_0 = arith.constant 0 : i32
    return %arg0, %c0_i32 : i32, i32
  }
  func.func @transform_1(%arg0: i32) -> (i32, i32, i32) {
    %c0_i32 = arith.constant 0 : i32
    %c0_i32_0 = arith.constant 0 : i32
    %c0_i32_1 = arith.constant 0 : i32
    %c0_i32_2 = arith.constant 0 : i32
    return %c0_i32, %c0_i32_0, %c0_i32_1 : i32, i32, i32
  }
  func.func @transform_2(%arg0: i32) -> (i32, i32, i32) {
    %c0_i32 = arith.constant 0 : i32
    %c0_i32_0 = arith.constant 0 : i32
    %c0_i32_1 = arith.constant 0 : i32
    %c0_i32_2 = arith.constant 0 : i32
    return %c0_i32, %c0_i32_0, %c0_i32_1 : i32, i32, i32
  }
  func.func @transform_3(%arg0: i32) -> (i32, i32, i32) {
    %c0_i32 = arith.constant 0 : i32
    %c0_i32_0 = arith.constant 0 : i32
    %c0_i32_1 = arith.constant 0 : i32
    %c0_i32_2 = arith.constant 0 : i32
    return %c0_i32, %c0_i32_0, %c0_i32_1 : i32, i32, i32
  }
  func.func @transform_4(%arg0: i32) -> (i32, i32, i32) {
    %c0_i32 = arith.constant 0 : i32
    %c0_i32_0 = arith.constant 0 : i32
    %c0_i32_1 = arith.constant 0 : i32
    %c0_i32_2 = arith.constant 0 : i32
    return %c0_i32, %c0_i32_0, %c0_i32_1 : i32, i32, i32
  }
  func.func @transform_5(%arg0: i32) -> (i32, i32) {
    %c0_i32 = arith.constant 0 : i32
    %c0_i32_0 = arith.constant 0 : i32
    return %arg0, %c0_i32 : i32, i32
  }
}

</mosaic_0001>

<llo_original>
// kernel: tpu_custom_call.1
$region0: #{tpu_custom_call.1}
  #allocation0 [shape = 'u32[]', space=smem, size = 0x4, offset = 0x4, fixed_abs, tag = 'smem constant byte address 0x4 - core index']
  #allocation1 [shape = 'u32[144,128]{1,0:T(1,128)}', space=vmem, size = 0x12000, scoped, tag = 'internal scratch']
  %s0 = inlined_call_operand.hbm [shape: f32[32,32], index: 0, kind: input, shape index: {}]
  %s1 = inlined_call_operand.hbm [shape: f32[2,16,32], index: 1, kind: input, shape index: {}]
  %s2 = inlined_call_operand.vmem [shape: f32[2,1,32], index: 2, kind: input, shape index: {}]
  %s3 = inlined_call_operand.hbm [shape: f32[2,32,32], index: 3, kind: input, shape index: {}]
  %s4 = inlined_call_operand.vmem [shape: f32[2,1,32], index: 4, kind: input, shape index: {}]
  %s5 = inlined_call_operand.hbm [shape: f32[32,64], index: 5, kind: output, shape index: {}]
  %s6 = sld [smem:[#allocation0]]
  $region65: #{tpu_custom_call.1} parent=0
    _
  %s8 = ssub.s32 1, %s6
  %s9 = scalar_select 0, %s8, %s6
  $region1: #{tpu_custom_call.1} parent=0
    #allocation2 [shape = 'u8[16384]{0}', space=vmem, size = 0x4000, scoped, tag = 'input window, operand 0']
    #allocation3 [shape = 's32[2]{0}', space=sflag, size = 0x8, scoped, tag = 'scoped memory for tpu_custom_call.1']
    #allocation4 [shape = 's32[2]{0}', space=sflag, size = 0x8, scoped, tag = 'scoped memory for tpu_custom_call.1']
    #allocation5 [shape = 'u8[16384]{0}', space=vmem, size = 0x4000, scoped, tag = 'input window, operand 1, single buffered']
    #allocation6 [shape = 's32[1]{0}', space=sflag, size = 0x4, scoped, tag = 'scoped memory for tpu_custom_call.1']
    #allocation7 [shape = 'u8[32768]{0}', space=vmem, size = 0x8000, scoped, tag = 'input window, operand 3, single buffered']
    #allocation8 [shape = 'u8[16384]{0}', space=vmem, size = 0x4000, scoped, tag = 'output window, operand 0']
    %10 = vsyncpa [#allocation3], 0
    %s11 = scalar_lea.sflag [#allocation3], 1
    %12 = vsyncpa %s11, 0
    %13 = vsyncpa [#allocation6], 0
    %14 = vsyncpa [#allocation4], 0
    %s15 = scalar_lea.sflag [#allocation4], 1
    %16 = vsyncpa %s15, 0
    loop: start=0, step=1, limit=4
    $region2: #{tpu_custom_call.1} parent=1 // loop_pre_header
      _
    $region3: #{tpu_custom_call.1} parent=1 // loop_header
      %s18 = sphi 0, %s22
      %p19 = scmp.ge.s32.totalorder %s18, 4
      %s28 = sphi 0, %s30
      %s31 = sphi 0, %s28
      %s32 = sphi 0, %s31
      %s48 = sphi 0, %s32
      %s52 = sphi 0, %s52
      %s54 = sphi 0, %s52
      %s55 = sphi 0, %s54
      %s69 = sphi 0, %s55
      %s73 = sphi 0, %s73
      %s75 = sphi 0, %s73
      %s76 = sphi 0, %s75
      %s90 = sphi 0, %s76
      %s94 = sphi 0, %s94
      %s96 = sphi 0, %s94
      %s97 = sphi 0, %s96
      %s111 = sphi 0, %s97
      %s115 = sphi 0, %s115
      %s117 = sphi 0, %s115
      %s118 = sphi 0, %s117
      %s132 = sphi 0, %s118
      %s138 = sphi 0, %s140
      %s141 = sphi 0, %s138
      %s142 = sphi 0, %s141
      %s158 = sphi 0, %s142
    $region4: #{tpu_custom_call.1} parent=1 // loop_header_branch
      %21 = sbr.rel (%p19) target = $region8
    $region5: #{tpu_custom_call.1} parent=1 // loop_body
      %s23 = ssub.s32 %s18, 1
      %s24 = ssub.s32 %s18, 2
      %s25 = sadd.s32 %s18, 1
      %s26 = ssub.s32 %s18, %s25
      %p27 = scmp.eq.s32.totalorder %s26, 0
      %s29 = sadd.s32 %s28, 1
      %s30 = scalar_select %p27, %s28, %s29
      %p33 = pneg %p27
      %p34 = scmp.eq.s32.totalorder %s18, 1
      %p35 = por %p33, %p34
      %p36 = scmp.ne.s32.totalorder %s28, %s31
      %p37 = scmp.eq.s32.totalorder %s18, 0
      %p38 = por %p36, %p37
      %p39 = scmp.ne.s32.totalorder %s28, %s31
      %p40 = scmp.eq.s32.totalorder %s23, 1
      %p41 = por %p39, %p40
      %p42 = scmp.ne.s32.totalorder %s31, %s32
      %p43 = scmp.eq.s32.totalorder %s23, 0
      %p44 = por %p42, %p43
      %p45 = scmp.ne.s32.totalorder %s31, %s32
      %p46 = scmp.eq.s32.totalorder %s24, 1
      %p47 = por %p45, %p46
      %p49 = scmp.ne.s32.totalorder %s32, %s48
      %p50 = scmp.eq.s32.totalorder %s24, 0
      %p51 = por %p49, %p50
      %s53 = sadd.s32 %s52, 1
      %p56 = scmp.eq.s32.totalorder %s18, 1
      %p57 = scmp.ne.s32.totalorder %s52, %s54
      %p58 = scmp.eq.s32.totalorder %s18, 0
      %p59 = por %p57, %p58
      %p60 = scmp.ne.s32.totalorder %s52, %s54
      %p61 = scmp.eq.s32.totalorder %s23, 1
      %p62 = por %p60, %p61
      %p63 = scmp.ne.s32.totalorder %s54, %s55
      %p64 = scmp.eq.s32.totalorder %s23, 0
      %p65 = por %p63, %p64
      %p66 = scmp.ne.s32.totalorder %s54, %s55
      %p67 = scmp.eq.s32.totalorder %s24, 1
      %p68 = por %p66, %p67
      %p70 = scmp.ne.s32.totalorder %s55, %s69
      %p71 = scmp.eq.s32.totalorder %s24, 0
      %p72 = por %p70, %p71
      %s74 = sadd.s32 %s73, 1
      %p77 = scmp.eq.s32.totalorder %s18, 1
      %p78 = scmp.ne.s32.totalorder %s73, %s75
      %p79 = scmp.eq.s32.totalorder %s18, 0
      %p80 = por %p78, %p79
      %p81 = scmp.ne.s32.totalorder %s73, %s75
      %p82 = scmp.eq.s32.totalorder %s23, 1
      %p83 = por %p81, %p82
      %p84 = scmp.ne.s32.totalorder %s75, %s76
      %p85 = scmp.eq.s32.totalorder %s23, 0
      %p86 = por %p84, %p85
      %p87 = scmp.ne.s32.totalorder %s75, %s76
      %p88 = scmp.eq.s32.totalorder %s24, 1
      %p89 = por %p87, %p88
      %p91 = scmp.ne.s32.totalorder %s76, %s90
      %p92 = scmp.eq.s32.totalorder %s24, 0
      %p93 = por %p91, %p92
      %s95 = sadd.s32 %s94, 1
      %p98 = scmp.eq.s32.totalorder %s18, 1
      %p99 = scmp.ne.s32.totalorder %s94, %s96
      %p100 = scmp.eq.s32.totalorder %s18, 0
      %p101 = por %p99, %p100
      %p102 = scmp.ne.s32.totalorder %s94, %s96
      %p103 = scmp.eq.s32.totalorder %s23, 1
      %p104 = por %p102, %p103
      %p105 = scmp.ne.s32.totalorder %s96, %s97
      %p106 = scmp.eq.s32.totalorder %s23, 0
      %p107 = por %p105, %p106
      %p108 = scmp.ne.s32.totalorder %s96, %s97
      %p109 = scmp.eq.s32.totalorder %s24, 1
      %p110 = por %p108, %p109
      %p112 = scmp.ne.s32.totalorder %s97, %s111
      %p113 = scmp.eq.s32.totalorder %s24, 0
      %p114 = por %p112, %p113
      %s116 = sadd.s32 %s115, 1
      %p119 = scmp.eq.s32.totalorder %s18, 1
      %p120 = scmp.ne.s32.totalorder %s115, %s117
      %p121 = scmp.eq.s32.totalorder %s18, 0
      %p122 = por %p120, %p121
      %p123 = scmp.ne.s32.totalorder %s115, %s117
      %p124 = scmp.eq.s32.totalorder %s23, 1
      %p125 = por %p123, %p124
      %p126 = scmp.ne.s32.totalorder %s117, %s118
      %p127 = scmp.eq.s32.totalorder %s23, 0
      %p128 = por %p126, %p127
      %p129 = scmp.ne.s32.totalorder %s117, %s118
      %p130 = scmp.eq.s32.totalorder %s24, 1
      %p131 = por %p129, %p130
      %p133 = scmp.ne.s32.totalorder %s118, %s132
      %p134 = scmp.eq.s32.totalorder %s24, 0
      %p135 = por %p133, %p134
      %s136 = ssub.s32 %s18, %s25
      %p137 = scmp.eq.s32.totalorder %s136, 0
      %s139 = sadd.s32 %s138, 1
      %s140 = scalar_select %p137, %s138, %s139
      %p143 = pneg %p137
      %p144 = scmp.eq.s32.totalorder %s18, 1
      %p145 = por %p143, %p144
      %p146 = scmp.ne.s32.totalorder %s138, %s141
      %p147 = scmp.eq.s32.totalorder %s18, 0
      %p148 = por %p146, %p147
      %p149 = scmp.ne.s32.totalorder %s138, %s141
      %p150 = scmp.eq.s32.totalorder %s23, 1
      %p151 = por %p149, %p150
      %p152 = scmp.ne.s32.totalorder %s141, %s142
      %p153 = scmp.eq.s32.totalorder %s23, 0
      %p154 = por %p152, %p153
      %p155 = scmp.ne.s32.totalorder %s141, %s142
      %p156 = scmp.eq.s32.totalorder %s24, 1
      %p157 = por %p155, %p156
      %p159 = scmp.ne.s32.totalorder %s142, %s158
      %p160 = scmp.eq.s32.totalorder %s24, 0
      %p161 = por %p159, %p160
      %p162 = scmp.le.s32.totalorder 1, %s18
      %p163 = scmp.lt.s32.totalorder %s18, 3
      %p164 = pnand %p162, %p163
      %p165 = pneg %p164
      // Predicated region
      $region9: #{tpu_custom_call.1} parent=5 // pred_check
        _
      $region10: #{tpu_custom_call.1} parent=5 // pred_check_branch
        %167 = sbr.rel (%p164) target = $region12
      $region11: #{tpu_custom_call.1} parent=5 // pred_region
        %s168 = ssub.s32 %s18, 1
        // Predicated region
        $region13: #{tpu_custom_call.1} parent=11 // pred_check
          %p169 = pneg %p65
        $region14: #{tpu_custom_call.1} parent=11 // pred_check_branch
          %171 = sbr.rel (%p169) target = $region16
        $region15: #{tpu_custom_call.1} parent=11 // pred_region
          %s173 = ssub.s32 512, 512
          %174 = vsyncadd [#allocation6], %s173
          %s175 = sshll.u32 [#allocation5], 4
          %s176 = int_to_ptr.vmem [resolvable:$true] %s175
          %181 = dma.hbm_to_vmem [thread:$0]  %s1, 512, %s176, [#allocation6], 128, 128, 8
        $region16: #{tpu_custom_call.1} parent=11 // pred_fallthru
          _
        // Predicated region
        $region17: #{tpu_custom_call.1} parent=11 // pred_check
          %p182 = pneg %p86
        $region18: #{tpu_custom_call.1} parent=11 // pred_check_branch
          %184 = sbr.rel (%p182) target = $region20
        $region19: #{tpu_custom_call.1} parent=11 // pred_region
          _
        $region20: #{tpu_custom_call.1} parent=11 // pred_fallthru
          _
        // Predicated region
        $region21: #{tpu_custom_call.1} parent=11 // pred_check
          %p185 = pneg %p107
        $region22: #{tpu_custom_call.1} parent=11 // pred_check_branch
          %187 = sbr.rel (%p185) target = $region24
        $region23: #{tpu_custom_call.1} parent=11 // pred_region
          %s189 = ssub.s32 1024, 1024
          %190 = vsyncadd [#allocation6], %s189
          %s191 = sshll.u32 [#allocation7], 4
          %s192 = int_to_ptr.vmem [resolvable:$true] %s191
          %197 = dma.hbm_to_vmem [thread:$0]  %s3, 1024, %s192, [#allocation6], 128, 128, 8
        $region24: #{tpu_custom_call.1} parent=11 // pred_fallthru
          _
        // Predicated region
        $region25: #{tpu_custom_call.1} parent=11 // pred_check
          %p198 = pneg %p128
        $region26: #{tpu_custom_call.1} parent=11 // pred_check_branch
          %200 = sbr.rel (%p198) target = $region28
        $region27: #{tpu_custom_call.1} parent=11 // pred_region
          _
        $region28: #{tpu_custom_call.1} parent=11 // pred_fallthru
          _
      $region12: #{tpu_custom_call.1} parent=5 // pred_fallthru
        _
      %p201 = scmp.lt.s32.totalorder %s18, 2
      // Predicated region
      $region29: #{tpu_custom_call.1} parent=5 // pred_check
        %p202 = pneg %p201
      $region30: #{tpu_custom_call.1} parent=5 // pred_check_branch
        %204 = sbr.rel (%p202) target = $region32
      $region31: #{tpu_custom_call.1} parent=5 // pred_region
        // Predicated region
        $region33: #{tpu_custom_call.1} parent=31 // pred_check
          %p205 = pneg %p38
        $region34: #{tpu_custom_call.1} parent=31 // pred_check_branch
          %207 = sbr.rel (%p205) target = $region36
        $region35: #{tpu_custom_call.1} parent=31 // pred_region
          %s208 = sand.u32 %s28, 1
          %s209 = scalar_lea.sflag [#allocation3], %s208
          %s210 = sand.u32 %s28, 1
          %s211 = smul.addr %s210, 16
          %s212 = scalar_lea.vmem [#allocation2], %s211
          %s213 = smul.u32 2, %s18
          %s215 = ssub.s32 256, 256
          %216 = vsyncadd %s209, %s215
          %s217 = smul.addr %s213, 128
          %s218 = scalar_lea.hbm %s0, %s217
          %s219 = sshll.u32 %s212, 4
          %s220 = int_to_ptr.vmem [resolvable:$true] %s219
          %225 = dma.hbm_to_vmem [thread:$0]  %s218, 256, %s220, %s209, 128, 128, 8
        $region36: #{tpu_custom_call.1} parent=31 // pred_fallthru
          _
      $region32: #{tpu_custom_call.1} parent=5 // pred_fallthru
        _
      %p226 = scmp.le.s32.totalorder 1, %s18
      %p227 = scmp.lt.s32.totalorder %s18, 3
      %p228 = pnand %p226, %p227
      %p229 = pneg %p228
      // Predicated region
      $region37: #{tpu_custom_call.1} parent=5 // pred_check
        _
      $region38: #{tpu_custom_call.1} parent=5 // pred_check_branch
        %231 = sbr.rel (%p228) target = $region40
      $region39: #{tpu_custom_call.1} parent=5 // pred_region
        %s232 = ssub.s32 %s18, 1
        %s233 = sand.u32 %s31, 1
        %s234 = scalar_lea.sflag [#allocation3], %s233
        %s235 = sand.u32 %s31, 1
        %s236 = smul.addr %s235, 16
        %s237 = scalar_lea.vmem [#allocation2], %s236
        // Predicated region
        $region41: #{tpu_custom_call.1} parent=39 // pred_check
          %p238 = pneg %p44
        $region42: #{tpu_custom_call.1} parent=39 // pred_check_branch
          %240 = sbr.rel (%p238) target = $region44
        $region43: #{tpu_custom_call.1} parent=39 // pred_region
          %241 = dma.done %s234, 256
        $region44: #{tpu_custom_call.1} parent=39 // pred_fallthru
          _
        // Predicated region
        $region45: #{tpu_custom_call.1} parent=39 // pred_check
          %p242 = pneg %p65
        $region46: #{tpu_custom_call.1} parent=39 // pred_check_branch
          %244 = sbr.rel (%p242) target = $region48
        $region47: #{tpu_custom_call.1} parent=39 // pred_region
          %245 = dma.done [#allocation6], 512
        $region48: #{tpu_custom_call.1} parent=39 // pred_fallthru
          _
        // Predicated region
        $region49: #{tpu_custom_call.1} parent=39 // pred_check
          %p246 = pneg %p107
        $region50: #{tpu_custom_call.1} parent=39 // pred_check_branch
          %248 = sbr.rel (%p246) target = $region52
        $region51: #{tpu_custom_call.1} parent=39 // pred_region
          %249 = dma.done [#allocation6], 1024
        $region52: #{tpu_custom_call.1} parent=39 // pred_fallthru
          _
        %s250 = sand.u32 %s31, 1
        %s251 = scalar_lea.sflag [#allocation3], %s250
        %s252 = sand.u32 %s31, 1
        %s253 = smul.addr %s252, 16
        %s254 = scalar_lea.vmem [#allocation2], %s253
        %p255 = pneg %p44
        %p256 = pneg %p41
        %p257 = pneg %p65
        %p258 = pneg %p62
        %p259 = pneg %p86
        %p260 = pneg %p83
        %p261 = pneg %p107
        %p262 = pneg %p104
        %p263 = pneg %p128
        %p264 = pneg %p125
        %p265 = pneg %p154
        %p266 = pneg %p151
        %s267 = sand.u32 %s141, 1
        %s268 = scalar_lea.sflag [#allocation4], %s267
        %s269 = sand.u32 %s141, 1
        %s270 = smul.addr %s269, 16
        %s271 = scalar_lea.vmem [#allocation8], %s270
        %s272 = smul.u32 2, %s23
        %s273 = smul.u32 2, %s23
        %v274 = vld [vmem:[%s237] sm:$0xff]
        %v275 = vld [vmem:[%s237 + $0x8] sm:$0xff]
        %278 = vrot.lane.b32.xlu0 %v274, 127
        %v279 = vpop.permute.xlu0 %278
        %280 = vrot.lane.b32.xlu0 %v275, 127
        %v281 = vpop.permute.xlu0 %280
        %284 = vrot.lane.b32.xlu0 %v274, 15
        %v285 = vpop.permute.xlu0 %284
        %286 = vrot.lane.b32.xlu0 %v275, 15
        %v287 = vpop.permute.xlu0 %286
        %vm290 = vcmask 121856
        %v291 = vsel %vm290, %v279, %v285
        %v292 = vsel %vm290, %v281, %v287
        %293 = vrot.lane.b32.xlu0 %v274, 113
        %v294 = vpop.permute.xlu0 %293
        %295 = vrot.lane.b32.xlu0 %v275, 113
        %v296 = vpop.permute.xlu0 %295
        %299 = vrot.lane.b32.xlu0 %v274, 1
        %v300 = vpop.permute.xlu0 %299
        %301 = vrot.lane.b32.xlu0 %v275, 1
        %v302 = vpop.permute.xlu0 %301
        %vm305 = vcmask 7168
        %v306 = vsel %vm305, %v294, %v300
        %v307 = vsel %vm305, %v296, %v302
        %v308 = vld [vmem:[#allocation5] sm:$0xff]
        %v309 = vld [vmem:[#allocation5 + $0x8] sm:$0xff]
        %v310 = vld [vmem:[%s2] sm:$0x1]
        %v312 = vlaneseq
        %v313 = vshrl.u32 %v312, 7
        %v314 = vsub.s32 0, %v313
        %v315 = vrot.slane %v310, %v314
        %vm317 = vcmask 130048
        %v319 = vsel %vm317, %v291, 0
        %v322 = vsel %vm317, %v292, 0
        %v324 = vsel %vm317, %v274, 0
        %v326 = vsel %vm317, %v275, 0
        %v329 = vsel %vm317, %v306, 0
        %v332 = vsel %vm317, %v307, 0
        %334 = vmatprep.subr.mxu0 0.0
        %335 = vmatpush1.msra.mxu0 0.0
        %336 = vmatprep.subr.mxu0 0.0
        %337 = vmatpush1.msra.mxu0 0.0
        %338 = vmatprep.subr.mxu0 0.0
        %339 = vmatpush1.msra.mxu0 0.0
        %340 = vmatprep.subr.mxu0 0.0
        %341 = vmatpush1.msra.mxu0 0.0
        %342 = vmatprep.subr.mxu0 0.0
        %343 = vmatpush1.msra.mxu0 0.0
        %344 = vmatprep.subr.mxu0 0.0
        %345 = vmatpush1.msra.mxu0 0.0
        %346 = vmatprep.subr.mxu0 0.0
        %347 = vmatpush1.msra.mxu0 0.0
        %348 = vmatprep.subr.mxu0 0.0
        %349 = vmatpush1.msra.mxu0 0.0
        %350 = vmatprep.subr.mxu0 0.0
        %351 = vmatpush1.msra.mxu0 0.0
        %352 = vmatprep.subr.mxu0 0.0
        %353 = vmatpush1.msra.mxu0 0.0
        %354 = vmatprep.subr.mxu0 0.0
        %355 = vmatpush1.msra.mxu0 0.0
        %356 = vmatprep.subr.mxu0 0.0
        %357 = vmatpush1.msra.mxu0 0.0
        %358 = vmatprep.subr.mxu0 0.0
        %359 = vmatpush1.msra.mxu0 0.0
        %360 = vmatprep.subr.mxu0 0.0
        %361 = vmatpush1.msra.mxu0 0.0
        %362 = vmatprep.subr.mxu0 0.0
        %363 = vmatpush1.msra.mxu0 %v309
        %364 = vmatprep.subr.mxu0 0.0
        %365 = vmatpush1.msra.mxu0 %v308
        %366 = vmatprep.subr.mxu0 0.0
        %367 = vmatpush2.msra.mxu0 0.0
        %368 = vmatprep.subr.mxu0 0.0
        %369 = vmatpush2.msra.mxu0 0.0
        %370 = vmatprep.subr.mxu0 0.0
        %371 = vmatpush2.msra.mxu0 0.0
        %372 = vmatprep.subr.mxu0 0.0
        %373 = vmatpush2.msra.mxu0 0.0
        %374 = vmatprep.subr.mxu0 0.0
        %375 = vmatpush2.msra.mxu0 0.0
        %376 = vmatprep.subr.mxu0 0.0
        %377 = vmatpush2.msra.mxu0 0.0
        %378 = vmatprep.subr.mxu0 0.0
        %379 = vmatpush2.msra.mxu0 0.0
        %380 = vmatprep.subr.mxu0 0.0
        %381 = vmatpush2.msra.mxu0 0.0
        %382 = vmatprep.subr.mxu0 0.0
        %383 = vmatpush2.msra.mxu0 0.0
        %384 = vmatprep.subr.mxu0 0.0
        %385 = vmatpush2.msra.mxu0 0.0
        %386 = vmatprep.subr.mxu0 0.0
        %387 = vmatpush2.msra.mxu0 0.0
        %388 = vmatprep.subr.mxu0 0.0
        %389 = vmatpush2.msra.mxu0 0.0
        %390 = vmatprep.subr.mxu0 0.0
        %391 = vmatpush2.msra.mxu0 0.0
        %392 = vmatprep.subr.mxu0 0.0
        %393 = vmatpush2.msra.mxu0 0.0
        %394 = vmatprep.subr.mxu0 0.0
        %395 = vmatpush2.msra.mxu0 0.0
        %396 = vmatprep.subr.mxu0 0.0
        %397 = vmatpush2.msra.mxu0 0.0
        %398 = vmatprep.mubr.f32.mxu0 0.0
        %399 = vmatmul.mubr.f32.gmra.mxu0 %v319
        %v400 = vpop.f32.mrf.mxu0
        %v401 = vadd.f32 %v315, %v400
        %v402 = vpop.f32.mrf.mxu0
        %403 = vmatprep.mubr.f32.mxu0 0.0
        %404 = vmatmul.mubr.f32.gmra.mxu0 %v322
        %v405 = vpop.f32.mrf.mxu0
        %v406 = vadd.f32 %v315, %v405
        %v407 = vpop.f32.mrf.mxu0
        %408 = vmatprep.mubr.f32.mxu0 0.0
        %409 = vmatmul.mubr.f32.gmra.mxu0 %v324
        %v410 = vpop.f32.mrf.mxu0
        %v411 = vadd.f32 %v315, %v410
        %v412 = vpop.f32.mrf.mxu0
        %413 = vmatprep.mubr.f32.mxu0 0.0
        %414 = vmatmul.mubr.f32.gmra.mxu0 %v326
        %v415 = vpop.f32.mrf.mxu0
        %v416 = vadd.f32 %v315, %v415
        %v417 = vpop.f32.mrf.mxu0
        %418 = vmatprep.mubr.f32.mxu0 0.0
        %419 = vmatmul.mubr.f32.gmra.mxu0 %v329
        %v420 = vpop.f32.mrf.mxu0
        %v421 = vadd.f32 %v315, %v420
        %v422 = vpop.f32.mrf.mxu0
        %423 = vmatprep.mubr.f32.mxu0 0.0
        %424 = vmatmul.mubr.f32.gmra.mxu0 %v332
        %v425 = vpop.f32.mrf.mxu0
        %v426 = vadd.f32 %v315, %v425
        %v427 = vpop.f32.mrf.mxu0
        %428 = vdwg.mxu0
        %v429 = vmax.f32 %v401, 0.0
        %v430 = vmax.f32 %v406, 0.0
        %v431 = vmax.f32 %v411, 0.0
        %v432 = vmax.f32 %v416, 0.0
        %v433 = vmax.f32 %v421, 0.0
        %v434 = vmax.f32 %v426, 0.0
        %v435 = vld [vmem:[#allocation7] sm:$0xff]
        %v436 = vld [vmem:[#allocation7 + $0x8] sm:$0xff]
        %v437 = vld [vmem:[#allocation7 + $0x10] sm:$0xff]
        %v438 = vld [vmem:[#allocation7 + $0x18] sm:$0xff]
        %v439 = vld [vmem:[%s4] sm:$0x1]
        %v441 = vlaneseq
        %v442 = vshrl.u32 %v441, 7
        %v443 = vsub.s32 0, %v442
        %v444 = vrot.slane %v439, %v443
        %vm446 = vcmask 261120
        %v448 = vsel %vm446, %v429, 0
        %v451 = vsel %vm446, %v430, 0
        %v454 = vsel %vm446, %v431, 0
        %v457 = vsel %vm446, %v432, 0
        %v460 = vsel %vm446, %v433, 0
        %v463 = vsel %vm446, %v434, 0
        %465 = vmatprep.subr.mxu0 0.0
        %466 = vmatpush1.msra.mxu0 0.0
        %467 = vmatprep.subr.mxu0 0.0
        %468 = vmatpush1.msra.mxu0 0.0
        %469 = vmatprep.subr.mxu0 0.0
        %470 = vmatpush1.msra.mxu0 0.0
        %471 = vmatprep.subr.mxu0 0.0
        %472 = vmatpush1.msra.mxu0 0.0
        %473 = vmatprep.subr.mxu0 0.0
        %474 = vmatpush1.msra.mxu0 0.0
        %475 = vmatprep.subr.mxu0 0.0
        %476 = vmatpush1.msra.mxu0 0.0
        %477 = vmatprep.subr.mxu0 0.0
        %478 = vmatpush1.msra.mxu0 0.0
        %479 = vmatprep.subr.mxu0 0.0
        %480 = vmatpush1.msra.mxu0 0.0
        %481 = vmatprep.subr.mxu0 0.0
        %482 = vmatpush1.msra.mxu0 0.0
        %483 = vmatprep.subr.mxu0 0.0
        %484 = vmatpush1.msra.mxu0 0.0
        %485 = vmatprep.subr.mxu0 0.0
        %486 = vmatpush1.msra.mxu0 0.0
        %487 = vmatprep.subr.mxu0 0.0
        %488 = vmatpush1.msra.mxu0 0.0
        %489 = vmatprep.subr.mxu0 0.0
        %490 = vmatpush1.msra.mxu0 %v438
        %491 = vmatprep.subr.mxu0 0.0
        %492 = vmatpush1.msra.mxu0 %v437
        %493 = vmatprep.subr.mxu0 0.0
        %494 = vmatpush1.msra.mxu0 %v436
        %495 = vmatprep.subr.mxu0 0.0
        %496 = vmatpush1.msra.mxu0 %v435
        %497 = vmatprep.subr.mxu0 0.0
        %498 = vmatpush2.msra.mxu0 0.0
        %499 = vmatprep.subr.mxu0 0.0
        %500 = vmatpush2.msra.mxu0 0.0
        %501 = vmatprep.subr.mxu0 0.0
        %502 = vmatpush2.msra.mxu0 0.0
        %503 = vmatprep.subr.mxu0 0.0
        %504 = vmatpush2.msra.mxu0 0.0
        %505 = vmatprep.subr.mxu0 0.0
        %506 = vmatpush2.msra.mxu0 0.0
        %507 = vmatprep.subr.mxu0 0.0
        %508 = vmatpush2.msra.mxu0 0.0
        %509 = vmatprep.subr.mxu0 0.0
        %510 = vmatpush2.msra.mxu0 0.0
        %511 = vmatprep.subr.mxu0 0.0
        %512 = vmatpush2.msra.mxu0 0.0
        %513 = vmatprep.subr.mxu0 0.0
        %514 = vmatpush2.msra.mxu0 0.0
        %515 = vmatprep.subr.mxu0 0.0
        %516 = vmatpush2.msra.mxu0 0.0
        %517 = vmatprep.subr.mxu0 0.0
        %518 = vmatpush2.msra.mxu0 0.0
        %519 = vmatprep.subr.mxu0 0.0
        %520 = vmatpush2.msra.mxu0 0.0
        %521 = vmatprep.subr.mxu0 0.0
        %522 = vmatpush2.msra.mxu0 0.0
        %523 = vmatprep.subr.mxu0 0.0
        %524 = vmatpush2.msra.mxu0 0.0
        %525 = vmatprep.subr.mxu0 0.0
        %526 = vmatpush2.msra.mxu0 0.0
        %527 = vmatprep.subr.mxu0 0.0
        %528 = vmatpush2.msra.mxu0 0.0
        %529 = vmatprep.mubr.f32.mxu0 0.0
        %530 = vmatmul.mubr.f32.gmra.mxu0 %v448
        %v531 = vpop.f32.mrf.mxu0
        %v532 = vadd.f32 %v444, %v531
        %v533 = vpop.f32.mrf.mxu0
        %534 = vmatprep.mubr.f32.mxu0 0.0
        %535 = vmatmul.mubr.f32.gmra.mxu0 %v451
        %v536 = vpop.f32.mrf.mxu0
        %v537 = vadd.f32 %v444, %v536
        %v538 = vpop.f32.mrf.mxu0
        %539 = vmatprep.mubr.f32.mxu0 0.0
        %540 = vmatmul.mubr.f32.gmra.mxu0 %v454
        %v541 = vpop.f32.mrf.mxu0
        %v542 = vadd.f32 %v444, %v541
        %v543 = vpop.f32.mrf.mxu0
        %544 = vmatprep.mubr.f32.mxu0 0.0
        %545 = vmatmul.mubr.f32.gmra.mxu0 %v457
        %v546 = vpop.f32.mrf.mxu0
        %v547 = vadd.f32 %v444, %v546
        %v548 = vpop.f32.mrf.mxu0
        %549 = vmatprep.mubr.f32.mxu0 0.0
        %550 = vmatmul.mubr.f32.gmra.mxu0 %v460
        %v551 = vpop.f32.mrf.mxu0
        %v552 = vadd.f32 %v444, %v551
        %v553 = vpop.f32.mrf.mxu0
        %554 = vmatprep.mubr.f32.mxu0 0.0
        %555 = vmatmul.mubr.f32.gmra.mxu0 %v463
        %v556 = vpop.f32.mrf.mxu0
        %v557 = vadd.f32 %v444, %v556
        %v558 = vpop.f32.mrf.mxu0
        %559 = vdwg.mxu0
        %v560 = vmax.f32 %v532, 0.0
        %v561 = vmax.f32 %v537, 0.0
        %v562 = vmax.f32 %v542, 0.0
        %v563 = vmax.f32 %v547, 0.0
        %v564 = vmax.f32 %v552, 0.0
        %v565 = vmax.f32 %v557, 0.0
        %v566 = vadd.f32 %v560, %v562
        %v567 = vadd.f32 %v561, %v563
        %v568 = vadd.f32 %v566, %v564
        %v569 = vadd.f32 %v567, %v565
        %v570 = vmul.f32 %v568, 0.33333334
        %v571 = vmul.f32 %v569, 0.33333334
        %572 = vrot.lane.b32.xlu0 %v274, 111
        %v573 = vpop.permute.xlu0 %572
        %574 = vrot.lane.b32.xlu0 %v275, 111
        %v575 = vpop.permute.xlu0 %574
        %v578 = vsel %vm290, %v573, %v279
        %v579 = vsel %vm290, %v575, %v281
        %580 = vrot.lane.b32.xlu0 %v274, 97
        %v581 = vpop.permute.xlu0 %580
        %582 = vrot.lane.b32.xlu0 %v275, 97
        %v583 = vpop.permute.xlu0 %582
        %v586 = vsel %vm305, %v581, %v294
        %v587 = vsel %vm305, %v583, %v296
        %588 = vrot.lane.b32.xlu0 %v274, 112
        %v589 = vpop.permute.xlu0 %588
        %590 = vrot.lane.b32.xlu0 %v275, 112
        %v591 = vpop.permute.xlu0 %590
        %s592 = scalar_lea.vmem [#allocation5], 16
        %v593 = vld [vmem:[%s592] sm:$0xff]
        %v594 = vld [vmem:[%s592 + $0x8] sm:$0xff]
        %s595 = scalar_lea.vmem %s2, 1
        %v596 = vld [vmem:[%s595] sm:$0x1]
        %v598 = vlaneseq
        %v599 = vshrl.u32 %v598, 7
        %v600 = vsub.s32 0, %v599
        %v601 = vrot.slane %v596, %v600
        %v604 = vsel %vm317, %v578, 0
        %v607 = vsel %vm317, %v579, 0
        %v609 = vsel %vm317, %v589, 0
        %v611 = vsel %vm317, %v591, 0
        %v614 = vsel %vm317, %v586, 0
        %v617 = vsel %vm317, %v587, 0
        %619 = vmatprep.subr.mxu0 0.0
        %620 = vmatpush1.msra.mxu0 0.0
        %621 = vmatprep.subr.mxu0 0.0
        %622 = vmatpush1.msra.mxu0 0.0
        %623 = vmatprep.subr.mxu0 0.0
        %624 = vmatpush1.msra.mxu0 0.0
        %625 = vmatprep.subr.mxu0 0.0
        %626 = vmatpush1.msra.mxu0 0.0
        %627 = vmatprep.subr.mxu0 0.0
        %628 = vmatpush1.msra.mxu0 0.0
        %629 = vmatprep.subr.mxu0 0.0
        %630 = vmatpush1.msra.mxu0 0.0
        %631 = vmatprep.subr.mxu0 0.0
        %632 = vmatpush1.msra.mxu0 0.0
        %633 = vmatprep.subr.mxu0 0.0
        %634 = vmatpush1.msra.mxu0 0.0
        %635 = vmatprep.subr.mxu0 0.0
        %636 = vmatpush1.msra.mxu0 0.0
        %637 = vmatprep.subr.mxu0 0.0
        %638 = vmatpush1.msra.mxu0 0.0
        %639 = vmatprep.subr.mxu0 0.0
        %640 = vmatpush1.msra.mxu0 0.0
        %641 = vmatprep.subr.mxu0 0.0
        %642 = vmatpush1.msra.mxu0 0.0
        %643 = vmatprep.subr.mxu0 0.0
        %644 = vmatpush1.msra.mxu0 0.0
        %645 = vmatprep.subr.mxu0 0.0
        %646 = vmatpush1.msra.mxu0 0.0
        %647 = vmatprep.subr.mxu0 0.0
        %648 = vmatpush1.msra.mxu0 %v594
        %649 = vmatprep.subr.mxu0 0.0
        %650 = vmatpush1.msra.mxu0 %v593
        %651 = vmatprep.subr.mxu0 0.0
        %652 = vmatpush2.msra.mxu0 0.0
        %653 = vmatprep.subr.mxu0 0.0
        %654 = vmatpush2.msra.mxu0 0.0
        %655 = vmatprep.subr.mxu0 0.0
        %656 = vmatpush2.msra.mxu0 0.0
        %657 = vmatprep.subr.mxu0 0.0
        %658 = vmatpush2.msra.mxu0 0.0
        %659 = vmatprep.subr.mxu0 0.0
        %660 = vmatpush2.msra.mxu0 0.0
        %661 = vmatprep.subr.mxu0 0.0
        %662 = vmatpush2.msra.mxu0 0.0
        %663 = vmatprep.subr.mxu0 0.0
        %664 = vmatpush2.msra.mxu0 0.0
        %665 = vmatprep.subr.mxu0 0.0
        %666 = vmatpush2.msra.mxu0 0.0
        %667 = vmatprep.subr.mxu0 0.0
        %668 = vmatpush2.msra.mxu0 0.0
        %669 = vmatprep.subr.mxu0 0.0
        %670 = vmatpush2.msra.mxu0 0.0
        %671 = vmatprep.subr.mxu0 0.0
        %672 = vmatpush2.msra.mxu0 0.0
        %673 = vmatprep.subr.mxu0 0.0
        %674 = vmatpush2.msra.mxu0 0.0
        %675 = vmatprep.subr.mxu0 0.0
        %676 = vmatpush2.msra.mxu0 0.0
        %677 = vmatprep.subr.mxu0 0.0
        %678 = vmatpush2.msra.mxu0 0.0
        %679 = vmatprep.subr.mxu0 0.0
        %680 = vmatpush2.msra.mxu0 0.0
        %681 = vmatprep.subr.mxu0 0.0
        %682 = vmatpush2.msra.mxu0 0.0
        %683 = vmatprep.mubr.f32.mxu0 0.0
        %684 = vmatmul.mubr.f32.gmra.mxu0 %v604
        %v685 = vpop.f32.mrf.mxu0
        %v686 = vadd.f32 %v601, %v685
        %v687 = vpop.f32.mrf.mxu0
        %688 = vmatprep.mubr.f32.mxu0 0.0
        %689 = vmatmul.mubr.f32.gmra.mxu0 %v607
        %v690 = vpop.f32.mrf.mxu0
        %v691 = vadd.f32 %v601, %v690
        %v692 = vpop.f32.mrf.mxu0
        %693 = vmatprep.mubr.f32.mxu0 0.0
        %694 = vmatmul.mubr.f32.gmra.mxu0 %v609
        %v695 = vpop.f32.mrf.mxu0
        %v696 = vadd.f32 %v601, %v695
        %v697 = vpop.f32.mrf.mxu0
        %698 = vmatprep.mubr.f32.mxu0 0.0
        %699 = vmatmul.mubr.f32.gmra.mxu0 %v611
        %v700 = vpop.f32.mrf.mxu0
        %v701 = vadd.f32 %v601, %v700
        %v702 = vpop.f32.mrf.mxu0
        %703 = vmatprep.mubr.f32.mxu0 0.0
        %704 = vmatmul.mubr.f32.gmra.mxu0 %v614
        %v705 = vpop.f32.mrf.mxu0
        %v706 = vadd.f32 %v601, %v705
        %v707 = vpop.f32.mrf.mxu0
        %708 = vmatprep.mubr.f32.mxu0 0.0
        %709 = vmatmul.mubr.f32.gmra.mxu0 %v617
        %v710 = vpop.f32.mrf.mxu0
        %v711 = vadd.f32 %v601, %v710
        %v712 = vpop.f32.mrf.mxu0
        %713 = vdwg.mxu0
        %v714 = vmax.f32 %v686, 0.0
        %v715 = vmax.f32 %v691, 0.0
        %v716 = vmax.f32 %v696, 0.0
        %v717 = vmax.f32 %v701, 0.0
        %v718 = vmax.f32 %v706, 0.0
        %v719 = vmax.f32 %v711, 0.0
        %s720 = scalar_lea.vmem [#allocation7], 32
        %v721 = vld [vmem:[%s720] sm:$0xff]
        %v722 = vld [vmem:[%s720 + $0x8] sm:$0xff]
        %v723 = vld [vmem:[%s720 + $0x10] sm:$0xff]
        %v724 = vld [vmem:[%s720 + $0x18] sm:$0xff]
        %s725 = scalar_lea.vmem %s4, 1
        %v726 = vld [vmem:[%s725] sm:$0x1]
        %v728 = vlaneseq
        %v729 = vshrl.u32 %v728, 7
        %v730 = vsub.s32 0, %v729
        %v731 = vrot.slane %v726, %v730
        %v734 = vsel %vm446, %v714, 0
        %v737 = vsel %vm446, %v715, 0
        %v740 = vsel %vm446, %v716, 0
        %v743 = vsel %vm446, %v717, 0
        %v746 = vsel %vm446, %v718, 0
        %v749 = vsel %vm446, %v719, 0
        %751 = vmatprep.subr.mxu0 0.0
        %752 = vmatpush1.msra.mxu0 0.0
        %753 = vmatprep.subr.mxu0 0.0
        %754 = vmatpush1.msra.mxu0 0.0
        %755 = vmatprep.subr.mxu0 0.0
        %756 = vmatpush1.msra.mxu0 0.0
        %757 = vmatprep.subr.mxu0 0.0
        %758 = vmatpush1.msra.mxu0 0.0
        %759 = vmatprep.subr.mxu0 0.0
        %760 = vmatpush1.msra.mxu0 0.0
        %761 = vmatprep.subr.mxu0 0.0
        %762 = vmatpush1.msra.mxu0 0.0
        %763 = vmatprep.subr.mxu0 0.0
        %764 = vmatpush1.msra.mxu0 0.0
        %765 = vmatprep.subr.mxu0 0.0
        %766 = vmatpush1.msra.mxu0 0.0
        %767 = vmatprep.subr.mxu0 0.0
        %768 = vmatpush1.msra.mxu0 0.0
        %769 = vmatprep.subr.mxu0 0.0
        %770 = vmatpush1.msra.mxu0 0.0
        %771 = vmatprep.subr.mxu0 0.0
        %772 = vmatpush1.msra.mxu0 0.0
        %773 = vmatprep.subr.mxu0 0.0
        %774 = vmatpush1.msra.mxu0 0.0
        %775 = vmatprep.subr.mxu0 0.0
        %776 = vmatpush1.msra.mxu0 %v724
        %777 = vmatprep.subr.mxu0 0.0
        %778 = vmatpush1.msra.mxu0 %v723
        %779 = vmatprep.subr.mxu0 0.0
        %780 = vmatpush1.msra.mxu0 %v722
        %781 = vmatprep.subr.mxu0 0.0
        %782 = vmatpush1.msra.mxu0 %v721
        %783 = vmatprep.subr.mxu0 0.0
        %784 = vmatpush2.msra.mxu0 0.0
        %785 = vmatprep.subr.mxu0 0.0
        %786 = vmatpush2.msra.mxu0 0.0
        %787 = vmatprep.subr.mxu0 0.0
        %788 = vmatpush2.msra.mxu0 0.0
        %789 = vmatprep.subr.mxu0 0.0
        %790 = vmatpush2.msra.mxu0 0.0
        %791 = vmatprep.subr.mxu0 0.0
        %792 = vmatpush2.msra.mxu0 0.0
        %793 = vmatprep.subr.mxu0 0.0
        %794 = vmatpush2.msra.mxu0 0.0
        %795 = vmatprep.subr.mxu0 0.0
        %796 = vmatpush2.msra.mxu0 0.0
        %797 = vmatprep.subr.mxu0 0.0
        %798 = vmatpush2.msra.mxu0 0.0
        %799 = vmatprep.subr.mxu0 0.0
        %800 = vmatpush2.msra.mxu0 0.0
        %801 = vmatprep.subr.mxu0 0.0
        %802 = vmatpush2.msra.mxu0 0.0
        %803 = vmatprep.subr.mxu0 0.0
        %804 = vmatpush2.msra.mxu0 0.0
        %805 = vmatprep.subr.mxu0 0.0
        %806 = vmatpush2.msra.mxu0 0.0
        %807 = vmatprep.subr.mxu0 0.0
        %808 = vmatpush2.msra.mxu0 0.0
        %809 = vmatprep.subr.mxu0 0.0
        %810 = vmatpush2.msra.mxu0 0.0
        %811 = vmatprep.subr.mxu0 0.0
        %812 = vmatpush2.msra.mxu0 0.0
        %813 = vmatprep.subr.mxu0 0.0
        %814 = vmatpush2.msra.mxu0 0.0
        %815 = vmatprep.mubr.f32.mxu0 0.0
        %816 = vmatmul.mubr.f32.gmra.mxu0 %v734
        %v817 = vpop.f32.mrf.mxu0
        %v818 = vadd.f32 %v731, %v817
        %v819 = vpop.f32.mrf.mxu0
        %820 = vmatprep.mubr.f32.mxu0 0.0
        %821 = vmatmul.mubr.f32.gmra.mxu0 %v737
        %v822 = vpop.f32.mrf.mxu0
        %v823 = vadd.f32 %v731, %v822
        %v824 = vpop.f32.mrf.mxu0
        %825 = vmatprep.mubr.f32.mxu0 0.0
        %826 = vmatmul.mubr.f32.gmra.mxu0 %v740
        %v827 = vpop.f32.mrf.mxu0
        %v828 = vadd.f32 %v731, %v827
        %v829 = vpop.f32.mrf.mxu0
        %830 = vmatprep.mubr.f32.mxu0 0.0
        %831 = vmatmul.mubr.f32.gmra.mxu0 %v743
        %v832 = vpop.f32.mrf.mxu0
        %v833 = vadd.f32 %v731, %v832
        %v834 = vpop.f32.mrf.mxu0
        %835 = vmatprep.mubr.f32.mxu0 0.0
        %836 = vmatmul.mubr.f32.gmra.mxu0 %v746
        %v837 = vpop.f32.mrf.mxu0
        %v838 = vadd.f32 %v731, %v837
        %v839 = vpop.f32.mrf.mxu0
        %840 = vmatprep.mubr.f32.mxu0 0.0
        %841 = vmatmul.mubr.f32.gmra.mxu0 %v749
        %v842 = vpop.f32.mrf.mxu0
        %v843 = vadd.f32 %v731, %v842
        %v844 = vpop.f32.mrf.mxu0
        %845 = vdwg.mxu0
        %v846 = vmax.f32 %v818, 0.0
        %v847 = vmax.f32 %v823, 0.0
        %v848 = vmax.f32 %v828, 0.0
        %v849 = vmax.f32 %v833, 0.0
        %v850 = vmax.f32 %v838, 0.0
        %v851 = vmax.f32 %v843, 0.0
        %v852 = vadd.f32 %v846, %v848
        %v853 = vadd.f32 %v847, %v849
        %v854 = vadd.f32 %v852, %v850
        %v855 = vadd.f32 %v853, %v851
        %v856 = vmul.f32 %v854, 0.33333334
        %v857 = vmul.f32 %v855, 0.33333334
        %860 = vrot.lane.b32.xlu0 %v856, 32
        %v861 = vpop.permute.xlu0 %860
        %862 = vrot.lane.b32.xlu0 %v857, 32
        %v863 = vpop.permute.xlu0 %862
        %v866 = vsel %vm446, %v570, %v861
        %v867 = vsel %vm446, %v571, %v863
        %vm868 = vcmask 523264
        %869 = vst.msk [vmem:[%s271] sm:$0xff] %vm868, %v866
        %870 = vst.msk [vmem:[%s271 + $0x8] sm:$0xff] %vm868, %v867
        %s871 = sand.u32 %s141, 1
        %s872 = scalar_lea.sflag [#allocation4], %s871
        %s873 = sand.u32 %s141, 1
        %s874 = smul.addr %s873, 16
        %s875 = scalar_lea.vmem [#allocation8], %s874
        // Predicated region
        $region53: #{tpu_custom_call.1} parent=39 // pred_check
          %p876 = pneg %p151
        $region54: #{tpu_custom_call.1} parent=39 // pred_check_branch
          %878 = sbr.rel (%p876) target = $region56
        $region55: #{tpu_custom_call.1} parent=39 // pred_region
          %s879 = smul.u32 2, %s23
          %s881 = ssub.s32 256, 256
          %882 = vsyncadd %s872, %s881
          %s883 = smul.addr %s879, 128
          %s884 = scalar_lea.hbm %s5, %s883
          %s885 = sshll.u32 %s875, 4
          %s886 = int_to_ptr.vmem [resolvable:$true] %s885
          %891 = dma.vmem_to_hbm [thread:$0]  %s886, 256, %s884, %s872, 128, 128, 8
        $region56: #{tpu_custom_call.1} parent=39 // pred_fallthru
          _
      $region40: #{tpu_custom_call.1} parent=5 // pred_fallthru
        _
      %p892 = scmp.le.s32.totalorder 2, %s18
      // Predicated region
      $region57: #{tpu_custom_call.1} parent=5 // pred_check
        %p893 = pneg %p892
      $region58: #{tpu_custom_call.1} parent=5 // pred_check_branch
        %895 = sbr.rel (%p893) target = $region60
      $region59: #{tpu_custom_call.1} parent=5 // pred_region
        %s896 = ssub.s32 %s18, 2
        // Predicated region
        $region61: #{tpu_custom_call.1} parent=59 // pred_check
          %p897 = pneg %p157
        $region62: #{tpu_custom_call.1} parent=59 // pred_check_branch
          %899 = sbr.rel (%p897) target = $region64
        $region63: #{tpu_custom_call.1} parent=59 // pred_region
          %s900 = sand.u32 %s142, 1
          %s901 = scalar_lea.sflag [#allocation4], %s900
          %s902 = sand.u32 %s142, 1
          %s903 = smul.addr %s902, 16
          %s904 = scalar_lea.vmem [#allocation8], %s903
          %905 = dma.done %s901, 256
        $region64: #{tpu_custom_call.1} parent=59 // pred_fallthru
          _
      $region60: #{tpu_custom_call.1} parent=5 // pred_fallthru
        _
    $region6: #{tpu_custom_call.1} parent=1 // loop_footer
      %s22 = sadd.s32 1, %s18
    $region7: #{tpu_custom_call.1} parent=1 // loop_footer_branch
      %17 = sbr.rel target = $region3
    $region8: #{tpu_custom_call.1} parent=1 // loop_exit
      _
    %906 = vsyncpa [#allocation3], 1
    %s907 = scalar_lea.sflag [#allocation3], 1
    %908 = vsyncpa %s907, 1
    %909 = vsyncpa [#allocation6], 1
    %910 = vsyncpa [#allocation4], 1
    %s911 = scalar_lea.sflag [#allocation4], 1
    %912 = vsyncpa %s911, 1

</llo_original>
